<compile_context>
chip_gen: v5e
topology: v5e:2x2
jax: 0.10.0
libtpu: 0.0.40
codegen_flags: <defaults>
</compile_context>

<pallas_src>
import jax
import jax.numpy as jnp
from jax.experimental import pallas as pl
from jax.experimental.pallas import tpu as pltpu


# ----------------------------------------------------------------------------
# Path A kernel: whole (padded) image / channel-group per grid step,
# padding=1 fused in-kernel (no separate pad pass over HBM).
# ----------------------------------------------------------------------------
def _conv1x1_pad_abs_kernel(x_ref, w_ref, b_ref, o_ref):
    # x_ref: (Cin, H, W)  unpadded input image
    # w_ref: (Cg, Cin)    weights for this output-channel group
    # b_ref: (Cg, 1)      bias for this output-channel group
    # o_ref: (Cg, Hp, Wp) padded output (Hp = H+2, Wp = W+2)
    x = x_ref[...]
    cin, h, w_sz = x.shape
    hp = h + 2

    # Fused padding=1: build the zero-padded 3-channel value with two concats
    # (only the small Cin side is shifted; the big Cout store stays a single
    # aligned full-block store, so borders come out as abs(bias) for free).
    zrow = jnp.zeros((cin, 1, w_sz), x.dtype)
    xp = jnp.concatenate([zrow, x, zrow], axis=1)           # (Cin, Hp, W)
    zcol = jnp.zeros((cin, hp, 1), x.dtype)
    xp = jnp.concatenate([zcol, xp, zcol], axis=2)          # (Cin, Hp, Wp)

    wmat = w_ref[...]                                       # (Cg, Cin)
    bias = b_ref[...]                                       # (Cg, 1)

    # 1x1 conv == per-pixel channel mix: Cg x Cin broadcast FMAs on the VPU.
    acc = bias[:, :, None] + wmat[:, 0:1, None] * xp[0:1]
    for k in range(1, cin):
        acc = acc + wmat[:, k:k + 1, None] * xp[k:k + 1]

    # v1 * sign(v1) == abs(v1); leaky-relu branch of the module is dead code.
    o_ref[...] = jnp.abs(acc)


# ----------------------------------------------------------------------------
# Path B kernel: large images -- padded input flattened to lane-dense spatial.
# ----------------------------------------------------------------------------
def _conv1x1_abs_flat_kernel(x_ref, w_ref, b_ref, o_ref):
    # x_ref: (Cin, Ts)   w_ref: (Cout, Cin)   b_ref: (Cout, 1)   o_ref: (Cout, Ts)
    x = x_ref[...]
    wmat = w_ref[...]
    bias = b_ref[...]
    cin = wmat.shape[1]
    acc = bias + wmat[:, 0:1] * x[0:1, :]
    for k in range(1, cin):
        acc = acc + wmat[:, k:k + 1] * x[k:k + 1, :]
    o_ref[...] = jnp.abs(acc)


def _round_up(x, m):
    return ((x + m - 1) // m) * m


def _spatial_tile_cap():
    # Bigger tiles amortize the ~0.35us per-grid-step fixed cost; v7x's faster
    # HBM (~3.2 TB/s) needs ~4x larger tiles than v5e/v6e to stay near roofline.
    try:
        kind = jax.devices()[0].device_kind.lower()
    except Exception:  # pragma: no cover - defensive
        kind = ""
    return 131072 if "v7" in kind else 32768


# Padded spatial size (Hp*Wp) below which the fused-pad whole-image path is
# used; keeps the double-buffered per-step footprint ~11 MiB, well under the
# 32 MiB default scoped VMEM limit on every generation (incl. v7x's 64 MiB).
_WHOLE_IMAGE_MAX_S = 65536


def model_forward(x_nchw, weight, bias, negative_slope=0.01):
    """x_nchw: (N, 3, H, W) f32.  weight: (8, 3, 1, 1).  bias: (8,).

    Returns (N, 8, H+2, W+2) == abs(Conv2d(3,8,1,padding=1)(x)).
    `negative_slope` is kept for signature fidelity; that branch is dead code.
    """
    del negative_slope
    N, Cin, H, W = x_nchw.shape
    Cout = weight.shape[0]
    Hp, Wp = H + 2, W + 2
    S = Hp * Wp

    w_mat = weight.reshape(Cout, Cin).astype(jnp.float32)   # (8, 3)
    b_mat = bias.reshape(Cout, 1).astype(jnp.float32)       # (8, 1)
    flops = 2 * N * Cout * Cin * S

    if S <= _WHOLE_IMAGE_MAX_S:
        # ---------------- Path A: fused padding, whole image per grid step.
        # For a single image, split output channels into 2 groups so the grid
        # has >= 2 steps and both v7x TensorCores are used.
        G = 2 if N == 1 else 1
        Cg = Cout // G
        w_g = w_mat.reshape(G, Cg, Cin)
        b_g = b_mat.reshape(G, Cg, 1)

        bytes_accessed = 4 * (N * Cin * H * W + N * Cout * S + Cout * Cin + Cout)
        return pl.pallas_call(
            _conv1x1_pad_abs_kernel,
            out_shape=jax.ShapeDtypeStruct((N, Cout, Hp, Wp), jnp.float32),
            grid_spec=pltpu.PrefetchScalarGridSpec(
                num_scalar_prefetch=0,
                grid=(N, G),
                in_specs=[
                    # batch dim squeezed; whole unpadded image per step
                    pl.BlockSpec((None, Cin, H, W), lambda n, g: (n, 0, 0, 0)),
                    # per-group weight / bias (resident-sized, trivially small)
                    pl.BlockSpec((None, Cg, Cin), lambda n, g: (g, 0, 0)),
                    pl.BlockSpec((None, Cg, 1), lambda n, g: (g, 0, 0)),
                ],
                out_specs=pl.BlockSpec((None, Cg, Hp, Wp),
                                       lambda n, g: (n, g, 0, 0)),
            ),
            compiler_params=pltpu.CompilerParams(
                dimension_semantics=("parallel", "parallel")),
            cost_estimate=pl.CostEstimate(
                flops=flops, transcendentals=0, bytes_accessed=bytes_accessed),
        )(x_nchw, w_g, b_g)

    # ---------------- Path B: large images -- flat spatial lanes, tiled over S.
    # TODO(synk): the pad pass could also be fused here via row tiling + manual
    # strided DMA (pl.ANY + make_async_copy) to save one small HBM pass.
    x_pad = jnp.pad(x_nchw, ((0, 0), (0, 0), (1, 1), (1, 1)))
    x_flat = x_pad.reshape(N, Cin, S)                        # contiguous view

    cap = _spatial_tile_cap()
    Ts = S if S <= cap else cap
    # Guarantee >= 4 grid steps so v7x's two TensorCores both get work.
    if N * pl.cdiv(S, Ts) < 4:
        want_tiles = -(-4 // N)                              # ceil(4 / N)
        Ts = min(Ts, _round_up(-(-S // want_tiles), 128))
    grid = (N, pl.cdiv(S, Ts))

    # Double-buffered in+out tiles; explicit limit avoids surprise OOM /
    # pipeline-depth reduction on v7x (64 MiB physical, 32 MiB default scoped)
    # if the tile cap is raised further.
    vmem_budget = 2 * (Cin + Cout) * Ts * 4 + (2 << 20)
    vmem_limit = int(min(100 << 20, max(32 << 20, 2 * vmem_budget)))
    bytes_accessed = 4 * (N * Cin * S + N * Cout * S + Cout * Cin + Cout)

    out_flat = pl.pallas_call(
        _conv1x1_abs_flat_kernel,
        out_shape=jax.ShapeDtypeStruct((N, Cout, S), jnp.float32),
        grid_spec=pltpu.PrefetchScalarGridSpec(
            num_scalar_prefetch=0,
            grid=grid,
            in_specs=[
                pl.BlockSpec((None, Cin, Ts), lambda n, s: (n, 0, s)),
                pl.BlockSpec((Cout, Cin), lambda n, s: (0, 0)),
                pl.BlockSpec((Cout, 1), lambda n, s: (0, 0)),
            ],
            out_specs=pl.BlockSpec((None, Cout, Ts), lambda n, s: (n, 0, s)),
        ),
        compiler_params=pltpu.CompilerParams(
            dimension_semantics=("parallel", "parallel"),
            vmem_limit_bytes=vmem_limit),
        cost_estimate=pl.CostEstimate(
            flops=flops, transcendentals=0, bytes_accessed=bytes_accessed),
    )(x_flat, w_mat, b_mat)

    # (N, Cout, S) -> (N, Cout, Hp, Wp): contiguous reshape, free (no transpose).
    return out_flat.reshape(N, Cout, Hp, Wp)


if __name__ == "__main__":
    key = jax.random.PRNGKey(0)
    k_x, k_w, k_b, k_x2 = jax.random.split(key, 4)

    Cin, Cout = 3, 8
    weight = jax.random.normal(k_w, (Cout, Cin, 1, 1), dtype=jnp.float32) * 0.1
    bias = jax.random.normal(k_b, (Cout,), dtype=jnp.float32) * 0.1

    fwd = jax.jit(model_forward)

    def reference(x):
        xp = jnp.pad(x, ((0, 0), (0, 0), (1, 1), (1, 1)))
        v1 = jnp.einsum("nchw,oc->nohw", xp, weight.reshape(Cout, Cin)) \
            + bias[None, :, None, None]
        return v1 * jnp.sign(v1)

    # Small batch=2 case (exercises the per-image grid axis).
    x_a = jax.random.normal(k_x, (2, Cin, 16, 16), dtype=jnp.float32)
    out_a = jax.block_until_ready(fwd(x_a, weight, bias))
    assert out_a.shape == (2, Cout, 18, 18)
    assert jnp.allclose(out_a, reference(x_a), atol=1e-5, rtol=1e-5)

    # Single-image case matching the module spec (exercises the N==1
    # channel-group split so a v7x grid still has >= 2 steps).
    x_b = jax.random.normal(k_x2, (1, Cin, 64, 64), dtype=jnp.float32)
    out_b = jax.block_until_ready(fwd(x_b, weight, bias))
    assert out_b.shape == (1, Cout, 66, 66)
    assert jnp.allclose(out_b, reference(x_b), atol=1e-5, rtol=1e-5)

    print("KERNEL_OK")
</pallas_src>

<mosaic_0001>
module attributes {stable_mosaic.version = 11 : i64} {
  func.func @_conv1x1_pad_abs_kernel(%arg0: i32, %arg1: i32, %arg2: memref<1x3x16x16xf32, #tpu.memory_space<vmem>>, %arg3: memref<1x8x3xf32, #tpu.memory_space<vmem>>, %arg4: memref<1x8x1xf32, #tpu.memory_space<vmem>>, %arg5: memref<1x8x18x18xf32, #tpu.memory_space<vmem>>) attributes {dimension_semantics = [#tpu.dimension_semantics<parallel>, #tpu.dimension_semantics<parallel>], iteration_bounds = array<i64: 2, 1>, scalar_prefetch = 0 : i64, scratch_operands = 0 : i64, tpu.core_type = #tpu.core_type<tc>, window_params = [{transform_indices = @transform_0, window_bounds = array<i64: 1, 3, 16, 16>}, {transform_indices = @transform_1, window_bounds = array<i64: 1, 8, 3>}, {transform_indices = @transform_2, window_bounds = array<i64: 1, 8, 1>}, {transform_indices = @transform_3, window_bounds = array<i64: 1, 8, 18, 18>}]} {
    %c0 = arith.constant 0 : index
    %c0_0 = arith.constant 0 : index
    %c0_1 = arith.constant 0 : index
    %c0_2 = arith.constant 0 : index
    %0 = vector.load %arg2[%c0, %c0_0, %c0_1, %c0_2] : memref<1x3x16x16xf32, #tpu.memory_space<vmem>>, vector<1x3x16x16xf32>
    %1 = vector.shape_cast %0 : vector<1x3x16x16xf32> to vector<3x16x16xf32>
    %cst = arith.constant 0.000000e+00 : f32
    %2 = vector.broadcast %cst : f32 to vector<3x1x16xf32>
    %3 = tpu.concatenate %2, %1, %2 in 1 : vector<3x1x16xf32>, vector<3x16x16xf32>, vector<3x1x16xf32> -> vector<3x18x16xf32>
    %cst_3 = arith.constant 0.000000e+00 : f32
    %4 = vector.broadcast %cst_3 : f32 to vector<3x18x1xf32>
    %5 = tpu.concatenate %4, %3, %4 in 2 : vector<3x18x1xf32>, vector<3x18x16xf32>, vector<3x18x1xf32> -> vector<3x18x18xf32>
    %c0_4 = arith.constant 0 : index
    %c0_5 = arith.constant 0 : index
    %c0_6 = arith.constant 0 : index
    %6 = vector.load %arg3[%c0_4, %c0_5, %c0_6] : memref<1x8x3xf32, #tpu.memory_space<vmem>>, vector<1x8x3xf32>
    %7 = vector.shape_cast %6 : vector<1x8x3xf32> to vector<8x3xf32>
    %c0_7 = arith.constant 0 : index
    %c0_8 = arith.constant 0 : index
    %c0_9 = arith.constant 0 : index
    %8 = vector.load %arg4[%c0_7, %c0_8, %c0_9] : memref<1x8x1xf32, #tpu.memory_space<vmem>>, vector<1x8x1xf32>
    %9 = vector.shape_cast %8 : vector<1x8x1xf32> to vector<8x1xf32>
    %10 = vector.shape_cast %9 : vector<8x1xf32> to vector<8x1x1xf32>
    %11 = vector.extract_strided_slice %7 {offsets = [0, 0], sizes = [8, 1], strides = [1, 1]} : vector<8x3xf32> to vector<8x1xf32>
    %12 = vector.shape_cast %11 : vector<8x1xf32> to vector<8x1x1xf32>
    %13 = vector.extract_strided_slice %5 {offsets = [0, 0, 0], sizes = [1, 18, 18], strides = [1, 1, 1]} : vector<3x18x18xf32> to vector<1x18x18xf32>
    %14 = vector.broadcast %12 : vector<8x1x1xf32> to vector<8x18x18xf32>
    %15 = vector.broadcast %13 : vector<1x18x18xf32> to vector<8x18x18xf32>
    %16 = arith.mulf %14, %15 : vector<8x18x18xf32>
    %17 = vector.broadcast %10 : vector<8x1x1xf32> to vector<8x18x18xf32>
    %18 = arith.addf %17, %16 : vector<8x18x18xf32>
    %19 = vector.extract_strided_slice %7 {offsets = [0, 1], sizes = [8, 1], strides = [1, 1]} : vector<8x3xf32> to vector<8x1xf32>
    %20 = vector.shape_cast %19 : vector<8x1xf32> to vector<8x1x1xf32>
    %21 = vector.extract_strided_slice %5 {offsets = [1, 0, 0], sizes = [1, 18, 18], strides = [1, 1, 1]} : vector<3x18x18xf32> to vector<1x18x18xf32>
    %22 = vector.broadcast %20 : vector<8x1x1xf32> to vector<8x18x18xf32>
    %23 = vector.broadcast %21 : vector<1x18x18xf32> to vector<8x18x18xf32>
    %24 = arith.mulf %22, %23 : vector<8x18x18xf32>
    %25 = arith.addf %18, %24 : vector<8x18x18xf32>
    %26 = vector.extract_strided_slice %7 {offsets = [0, 2], sizes = [8, 1], strides = [1, 1]} : vector<8x3xf32> to vector<8x1xf32>
    %27 = vector.shape_cast %26 : vector<8x1xf32> to vector<8x1x1xf32>
    %28 = vector.extract_strided_slice %5 {offsets = [2, 0, 0], sizes = [1, 18, 18], strides = [1, 1, 1]} : vector<3x18x18xf32> to vector<1x18x18xf32>
    %29 = vector.broadcast %27 : vector<8x1x1xf32> to vector<8x18x18xf32>
    %30 = vector.broadcast %28 : vector<1x18x18xf32> to vector<8x18x18xf32>
    %31 = arith.mulf %29, %30 : vector<8x18x18xf32>
    %32 = arith.addf %25, %31 : vector<8x18x18xf32>
    %33 = math.absf %32 : vector<8x18x18xf32>
    %c0_10 = arith.constant 0 : index
    %c0_11 = arith.constant 0 : index
    %c0_12 = arith.constant 0 : index
    %c0_13 = arith.constant 0 : index
    %34 = vector.load %arg5[%c0_10, %c0_11, %c0_12, %c0_13] : memref<1x8x18x18xf32, #tpu.memory_space<vmem>>, vector<1x8x18x18xf32>
    %35 = vector.shape_cast %34 : vector<1x8x18x18xf32> to vector<8x18x18xf32>
    %36 = vector.shape_cast %33 : vector<8x18x18xf32> to vector<1x8x18x18xf32>
    tpu.vector_store %arg5[%c0_10, %c0_11, %c0_12, %c0_13], %36 {strides = array<i32>} : memref<1x8x18x18xf32, #tpu.memory_space<vmem>>, vector<1x8x18x18xf32>,
    return
  }
  func.func @transform_0(%arg0: i32, %arg1: i32) -> (i32, i32, i32, i32) {
    %c0_i32 = arith.constant 0 : i32
    %c0_i32_0 = arith.constant 0 : i32
    %c0_i32_1 = arith.constant 0 : i32
    %c0_i32_2 = arith.constant 0 : i32
    return %arg0, %c0_i32, %c0_i32_0, %c0_i32_1 : i32, i32, i32, i32
  }
  func.func @transform_1(%arg0: i32, %arg1: i32) -> (i32, i32, i32) {
    %c0_i32 = arith.constant 0 : i32
    %c0_i32_0 = arith.constant 0 : i32
    %c0_i32_1 = arith.constant 0 : i32
    return %arg1, %c0_i32, %c0_i32_0 : i32, i32, i32
  }
  func.func @transform_2(%arg0: i32, %arg1: i32) -> (i32, i32, i32) {
    %c0_i32 = arith.constant 0 : i32
    %c0_i32_0 = arith.constant 0 : i32
    %c0_i32_1 = arith.constant 0 : i32
    return %arg1, %c0_i32, %c0_i32_0 : i32, i32, i32
  }
  func.func @transform_3(%arg0: i32, %arg1: i32) -> (i32, i32, i32, i32) {
    %c0_i32 = arith.constant 0 : i32
    %c0_i32_0 = arith.constant 0 : i32
    %c0_i32_1 = arith.constant 0 : i32
    return %arg0, %arg1, %c0_i32, %c0_i32_0 : i32, i32, i32, i32
  }
}

</mosaic_0001>

<llo_original>
// kernel: model_forward.1
$region0: #{model_forward.1}
  #allocation0 [shape = 'u32[]', space=smem, size = 0x4, offset = 0x4, fixed_abs, tag = 'smem constant byte address 0x4 - core index']
  #allocation1 [shape = 'u32[72,128]{1,0:T(1,128)}', space=vmem, size = 0x9000, scoped, tag = 'internal scratch']
  %s0 = inlined_call_operand.hbm [shape: f32[2,3,16,16], index: 0, kind: input, shape index: {}]
  %s1 = inlined_call_operand.vmem [shape: f32[1,8,3], index: 1, kind: input, shape index: {}]
  %s2 = inlined_call_operand.vmem [shape: f32[1,8,1], index: 2, kind: input, shape index: {}]
  %s3 = inlined_call_operand.vmem [shape: f32[2,8,18,18], index: 3, kind: output, shape index: {}]
  %s4 = sld [smem:[#allocation0]]
  $region49: #{model_forward.1} parent=0
    _
  %s6 = ssub.s32 1, %s4
  %s7 = scalar_select 0, %s6, %s4
  $region1: #{model_forward.1} parent=0
    #allocation2 [shape = 'u8[49152]{0}', space=vmem, size = 0xc000, scoped, tag = 'input window, operand 0']
    #allocation3 [shape = 's32[2]{0}', space=sflag, size = 0x8, scoped, tag = 'scoped memory for model_forward.1']
    %8 = vsyncpa [#allocation3], 0
    %s9 = scalar_lea.sflag [#allocation3], 1
    %10 = vsyncpa %s9, 0
    loop: start=0, step=1, limit=4
    $region2: #{model_forward.1} parent=1 // loop_pre_header
      _
    $region3: #{model_forward.1} parent=1 // loop_header
      %s12 = sphi 0, %s16
      %p13 = scmp.ge.s32.totalorder %s12, 4
      %s19 = sphi 0, %s31
      %s20 = sphi 0, %s27
      %s21 = sphi 0, %s19
      %s22 = sphi 0, %s20
      %s23 = sphi 0, %s21
      %s24 = sphi 0, %s22
      %s34 = sphi 0, %s36
      %s37 = sphi 0, %s34
      %s38 = sphi 0, %s37
      %s54 = sphi 0, %s38
      %s60 = sphi 0, %s62
      %s63 = sphi 0, %s60
      %s64 = sphi 0, %s63
      %s80 = sphi 0, %s64
      %s86 = sphi 0, %s88
      %s89 = sphi 0, %s86
      %s90 = sphi 0, %s89
      %s106 = sphi 0, %s90
      %s114 = sphi 0, %s116
      %s117 = sphi 0, %s114
      %s118 = sphi 0, %s117
      %s134 = sphi 0, %s118
    $region4: #{model_forward.1} parent=1 // loop_header_branch
      %15 = sbr.rel (%p13) target = $region8
    $region5: #{model_forward.1} parent=1 // loop_body
      %s17 = ssub.s32 %s12, 1
      %s18 = ssub.s32 %s12, 2
      %s25 = sadd.s32 1, %s20
      %p26 = scmp.ge.s32.totalorder %s25, 1
      %s27 = scalar_select %p26, 0, %s25
      %s28 = sadd.s32 1, %s19
      %s29 = scalar_select %p26, %s28, %s19
      %p30 = scmp.ge.s32.totalorder %s29, 2
      %s31 = scalar_select %p30, 0, %s29
      %s32 = ssub.s32 %s19, %s31
      %p33 = scmp.eq.s32.totalorder %s32, 0
      %s35 = sadd.s32 %s34, 1
      %s36 = scalar_select %p33, %s34, %s35
      %p39 = pneg %p33
      %p40 = scmp.eq.s32.totalorder %s12, 1
      %p41 = por %p39, %p40
      %p42 = scmp.ne.s32.totalorder %s34, %s37
      %p43 = scmp.eq.s32.totalorder %s12, 0
      %p44 = por %p42, %p43
      %p45 = scmp.ne.s32.totalorder %s34, %s37
      %p46 = scmp.eq.s32.totalorder %s17, 1
      %p47 = por %p45, %p46
      %p48 = scmp.ne.s32.totalorder %s37, %s38
      %p49 = scmp.eq.s32.totalorder %s17, 0
      %p50 = por %p48, %p49
      %p51 = scmp.ne.s32.totalorder %s37, %s38
      %p52 = scmp.eq.s32.totalorder %s18, 1
      %p53 = por %p51, %p52
      %p55 = scmp.ne.s32.totalorder %s38, %s54
      %p56 = scmp.eq.s32.totalorder %s18, 0
      %p57 = por %p55, %p56
      %s58 = ssub.s32 %s20, %s27
      %p59 = scmp.eq.s32.totalorder %s58, 0
      %s61 = sadd.s32 %s60, 1
      %s62 = scalar_select %p59, %s60, %s61
      %p65 = pneg %p59
      %p66 = scmp.eq.s32.totalorder %s12, 1
      %p67 = por %p65, %p66
      %p68 = scmp.ne.s32.totalorder %s60, %s63
      %p69 = scmp.eq.s32.totalorder %s12, 0
      %p70 = por %p68, %p69
      %p71 = scmp.ne.s32.totalorder %s60, %s63
      %p72 = scmp.eq.s32.totalorder %s17, 1
      %p73 = por %p71, %p72
      %p74 = scmp.ne.s32.totalorder %s63, %s64
      %p75 = scmp.eq.s32.totalorder %s17, 0
      %p76 = por %p74, %p75
      %p77 = scmp.ne.s32.totalorder %s63, %s64
      %p78 = scmp.eq.s32.totalorder %s18, 1
      %p79 = por %p77, %p78
      %p81 = scmp.ne.s32.totalorder %s64, %s80
      %p82 = scmp.eq.s32.totalorder %s18, 0
      %p83 = por %p81, %p82
      %s84 = ssub.s32 %s20, %s27
      %p85 = scmp.eq.s32.totalorder %s84, 0
      %s87 = sadd.s32 %s86, 1
      %s88 = scalar_select %p85, %s86, %s87
      %p91 = pneg %p85
      %p92 = scmp.eq.s32.totalorder %s12, 1
      %p93 = por %p91, %p92
      %p94 = scmp.ne.s32.totalorder %s86, %s89
      %p95 = scmp.eq.s32.totalorder %s12, 0
      %p96 = por %p94, %p95
      %p97 = scmp.ne.s32.totalorder %s86, %s89
      %p98 = scmp.eq.s32.totalorder %s17, 1
      %p99 = por %p97, %p98
      %p100 = scmp.ne.s32.totalorder %s89, %s90
      %p101 = scmp.eq.s32.totalorder %s17, 0
      %p102 = por %p100, %p101
      %p103 = scmp.ne.s32.totalorder %s89, %s90
      %p104 = scmp.eq.s32.totalorder %s18, 1
      %p105 = por %p103, %p104
      %p107 = scmp.ne.s32.totalorder %s90, %s106
      %p108 = scmp.eq.s32.totalorder %s18, 0
      %p109 = por %p107, %p108
      %s110 = ssub.s32 %s19, %s31
      %s111 = ssub.s32 %s20, %s27
      %s112 = sor.u32 %s110, %s111
      %p113 = scmp.eq.s32.totalorder %s112, 0
      %s115 = sadd.s32 %s114, 1
      %s116 = scalar_select %p113, %s114, %s115
      %p119 = pneg %p113
      %p120 = scmp.eq.s32.totalorder %s12, 1
      %p121 = por %p119, %p120
      %p122 = scmp.ne.s32.totalorder %s114, %s117
      %p123 = scmp.eq.s32.totalorder %s12, 0
      %p124 = por %p122, %p123
      %p125 = scmp.ne.s32.totalorder %s114, %s117
      %p126 = scmp.eq.s32.totalorder %s17, 1
      %p127 = por %p125, %p126
      %p128 = scmp.ne.s32.totalorder %s117, %s118
      %p129 = scmp.eq.s32.totalorder %s17, 0
      %p130 = por %p128, %p129
      %p131 = scmp.ne.s32.totalorder %s117, %s118
      %p132 = scmp.eq.s32.totalorder %s18, 1
      %p133 = por %p131, %p132
      %p135 = scmp.ne.s32.totalorder %s118, %s134
      %p136 = scmp.eq.s32.totalorder %s18, 0
      %p137 = por %p135, %p136
      %p138 = scmp.le.s32.totalorder 1, %s12
      %p139 = scmp.lt.s32.totalorder %s12, 3
      %p140 = pnand %p138, %p139
      %p141 = pneg %p140
      // Predicated region
      $region9: #{model_forward.1} parent=5 // pred_check
        _
      $region10: #{model_forward.1} parent=5 // pred_check_branch
        %143 = sbr.rel (%p140) target = $region12
      $region11: #{model_forward.1} parent=5 // pred_region
        %s144 = ssub.s32 %s12, 1
        // Predicated region
        $region13: #{model_forward.1} parent=11 // pred_check
          %p145 = pneg %p76
        $region14: #{model_forward.1} parent=11 // pred_check_branch
          %147 = sbr.rel (%p145) target = $region16
        $region15: #{model_forward.1} parent=11 // pred_region
          %p148 = scmp.lt.s32.totalorder %s22, 0
          %s149 = scalar_select %p148, %s22, 0
          %s150 = smul.addr %s149, 8
          %s151 = scalar_lea.vmem %s1, %s150
        $region16: #{model_forward.1} parent=11 // pred_fallthru
          _
        // Predicated region
        $region17: #{model_forward.1} parent=11 // pred_check
          %p152 = pneg %p102
        $region18: #{model_forward.1} parent=11 // pred_check_branch
          %154 = sbr.rel (%p152) target = $region20
        $region19: #{model_forward.1} parent=11 // pred_region
          %p155 = scmp.lt.s32.totalorder %s22, 0
          %s156 = scalar_select %p155, %s22, 0
          %s157 = smul.addr %s156, 8
          %s158 = scalar_lea.vmem %s2, %s157
        $region20: #{model_forward.1} parent=11 // pred_fallthru
          _
      $region12: #{model_forward.1} parent=5 // pred_fallthru
        _
      %p159 = scmp.lt.s32.totalorder %s12, 2
      // Predicated region
      $region21: #{model_forward.1} parent=5 // pred_check
        %p160 = pneg %p159
      $region22: #{model_forward.1} parent=5 // pred_check_branch
        %162 = sbr.rel (%p160) target = $region24
      $region23: #{model_forward.1} parent=5 // pred_region
        // Predicated region
        $region25: #{model_forward.1} parent=23 // pred_check
          %p163 = pneg %p44
        $region26: #{model_forward.1} parent=23 // pred_check_branch
          %165 = sbr.rel (%p163) target = $region28
        $region27: #{model_forward.1} parent=23 // pred_region
          %s166 = sand.u32 %s34, 1
          %s167 = scalar_lea.sflag [#allocation3], %s166
          %s168 = sand.u32 %s34, 1
          %s169 = smul.addr %s168, 48
          %s170 = scalar_lea.vmem [#allocation2], %s169
          %172 = vsyncadd %s167, 0
          %s173 = smul.addr %s19, 6
          %s174 = smul.addr %s173, 8
          %s175 = scalar_lea.hbm %s0, %s174
          %s176 = sshll.u32 %s175, 4
          %s177 = int_to_ptr.hbm [resolvable:$true] %s176
          %s178 = sshll.u32 %s170, 4
          %s179 = int_to_ptr.vmem [resolvable:$true] %s178
          %184 = dma.hbm_to_vmem [thread:$0]  %s177, 768, %s179, %s167, 128, 128, 8
        $region28: #{model_forward.1} parent=23 // pred_fallthru
          _
      $region24: #{model_forward.1} parent=5 // pred_fallthru
        _
      %p185 = scmp.le.s32.totalorder 1, %s12
      %p186 = scmp.lt.s32.totalorder %s12, 3
      %p187 = pnand %p185, %p186
      %p188 = pneg %p187
      // Predicated region
      $region29: #{model_forward.1} parent=5 // pred_check
        _
      $region30: #{model_forward.1} parent=5 // pred_check_branch
        %190 = sbr.rel (%p187) target = $region32
      $region31: #{model_forward.1} parent=5 // pred_region
        %s191 = ssub.s32 %s12, 1
        %s192 = sand.u32 %s37, 1
        %s193 = scalar_lea.sflag [#allocation3], %s192
        %s194 = sand.u32 %s37, 1
        %s195 = smul.addr %s194, 48
        %s196 = scalar_lea.vmem [#allocation2], %s195
        // Predicated region
        $region33: #{model_forward.1} parent=31 // pred_check
          %p197 = pneg %p50
        $region34: #{model_forward.1} parent=31 // pred_check_branch
          %199 = sbr.rel (%p197) target = $region36
        $region35: #{model_forward.1} parent=31 // pred_region
          %201 = dma.done %s193, 768
        $region36: #{model_forward.1} parent=31 // pred_fallthru
          _
        %s202 = sand.u32 %s37, 1
        %s203 = scalar_lea.sflag [#allocation3], %s202
        %s204 = sand.u32 %s37, 1
        %s205 = smul.addr %s204, 48
        %s206 = scalar_lea.vmem [#allocation2], %s205
        %p207 = pneg %p50
        %p208 = pneg %p47
        %p209 = scmp.lt.s32.totalorder %s22, 0
        %s210 = scalar_select %p209, %s22, 0
        %s211 = smul.addr %s210, 8
        %s212 = scalar_lea.vmem %s1, %s211
        %p213 = pneg %p76
        %p214 = pneg %p73
        %p215 = scmp.lt.s32.totalorder %s22, 0
        %s216 = scalar_select %p215, %s22, 0
        %s217 = smul.addr %s216, 8
        %s218 = scalar_lea.vmem %s2, %s217
        %p219 = pneg %p102
        %p220 = pneg %p99
        %p221 = pneg %p130
        %p222 = pneg %p127
        %s223 = smul.u32 8, %s22
        %p224 = scmp.lt.s32.totalorder %s21, 1
        %s225 = scalar_select %p224, %s21, 1
        %p226 = scmp.lt.s32.totalorder %s223, 7
        %s227 = scalar_select %p226, %s223, 7
        %s228 = smul.addr %s227, 3
        %s229 = smul.addr %s225, 24
        %s230 = sadd.s32 %s228, %s229
        %s231 = smul.addr %s230, 8
        %s232 = scalar_lea.vmem %s3, %s231
        %p233 = scmp.lt.s32.totalorder %s22, 0
        %s234 = scalar_select %p233, %s22, 0
        %s235 = smul.addr %s234, 8
        %s236 = scalar_lea.vmem %s1, %s235
        %p237 = scmp.lt.s32.totalorder %s22, 0
        %s238 = scalar_select %p237, %s22, 0
        %s239 = smul.addr %s238, 8
        %s240 = scalar_lea.vmem %s2, %s239
        %s241 = smul.u32 8, %s22
        %p242 = scmp.lt.s32.totalorder %s21, 1
        %s243 = scalar_select %p242, %s21, 1
        %p244 = scmp.lt.s32.totalorder %s241, 7
        %s245 = scalar_select %p244, %s241, 7
        %s246 = smul.addr %s245, 3
        %s247 = smul.addr %s243, 24
        %s248 = sadd.s32 %s246, %s247
        %s249 = smul.addr %s248, 8
        %s250 = scalar_lea.vmem %s3, %s249
        %s251 = smul.u32 8, %s22
        %v252 = vld [vmem:[%s196] sm:$0xff]
        %v253 = vld [vmem:[%s196 + $0x8] sm:$0xff]
        %v254 = vld [vmem:[%s196 + $0x10] sm:$0xff]
        %v255 = vld [vmem:[%s196 + $0x18] sm:$0xff]
        %v256 = vld [vmem:[%s196 + $0x20] sm:$0xff]
        %v257 = vld [vmem:[%s196 + $0x28] sm:$0xff]
        %vm264 = vcmask 1040384
        %v265 = vrot.slane %v252, 7
        %v266 = vrot.slane %v253, 7
        %v267 = vsel %vm264, %v265, %v266
        %v268 = vrot.slane %v254, 7
        %v269 = vrot.slane %v255, 7
        %v270 = vsel %vm264, %v268, %v269
        %v271 = vrot.slane %v256, 7
        %v272 = vrot.slane %v257, 7
        %v273 = vsel %vm264, %v271, %v272
        %v280 = vsel %vm264, 0.0, %v265
        %v281 = vsel %vm264, 0.0, %v268
        %v282 = vsel %vm264, 0.0, %v271
        %v283 = vsel %vm264, %v266, 0.0
        %v284 = vsel %vm264, %v269, 0.0
        %v285 = vsel %vm264, %v272, 0.0
        %292 = vrot.lane.b32.xlu0 %v280, 1
        %v293 = vpop.permute.xlu0 %292
        %294 = vrot.lane.b32.xlu0 %v267, 1
        %v295 = vpop.permute.xlu0 %294
        %296 = vrot.lane.b32.xlu0 %v283, 1
        %v297 = vpop.permute.xlu0 %296
        %298 = vrot.lane.b32.xlu0 %v281, 1
        %v299 = vpop.permute.xlu0 %298
        %300 = vrot.lane.b32.xlu0 %v270, 1
        %v301 = vpop.permute.xlu0 %300
        %302 = vrot.lane.b32.xlu0 %v284, 1
        %v303 = vpop.permute.xlu0 %302
        %304 = vrot.lane.b32.xlu0 %v282, 1
        %v305 = vpop.permute.xlu0 %304
        %306 = vrot.lane.b32.xlu0 %v273, 1
        %v307 = vpop.permute.xlu0 %306
        %308 = vrot.lane.b32.xlu0 %v285, 1
        %v309 = vpop.permute.xlu0 %308
        %vm319 = vcmask 7168
        %v320 = vsel %vm319, 0.0, %v293
        %v321 = vsel %vm319, 0.0, %v295
        %v322 = vsel %vm319, 0.0, %v297
        %v323 = vsel %vm319, 0.0, %v299
        %v324 = vsel %vm319, 0.0, %v301
        %v325 = vsel %vm319, 0.0, %v303
        %v326 = vsel %vm319, 0.0, %v305
        %v327 = vsel %vm319, 0.0, %v307
        %v328 = vsel %vm319, 0.0, %v309
        %vm329 = vcmask 138240
        %v330 = vsel %vm329, %v320, 0.0
        %v331 = vsel %vm329, %v321, 0.0
        %v332 = vsel %vm329, %v322, 0.0
        %v333 = vsel %vm329, %v323, 0.0
        %v334 = vsel %vm329, %v324, 0.0
        %v335 = vsel %vm329, %v325, 0.0
        %v336 = vsel %vm329, %v326, 0.0
        %v337 = vsel %vm329, %v327, 0.0
        %v338 = vsel %vm329, %v328, 0.0
        %v339 = vld [vmem:[%s236] sm:$0xff]
        %v340 = vld [vmem:[%s240] sm:$0xff]
        %v342 = vrot.slane %v340, 1
        %v343 = vrot.slane %v340, 2
        %v344 = vrot.slane %v340, 3
        %v345 = vrot.slane %v340, 4
        %v346 = vrot.slane %v340, 5
        %v347 = vrot.slane %v340, 6
        %v348 = vrot.slane %v340, 7
        %v350 = vrot.slane %v339, 1
        %v351 = vrot.slane %v339, 2
        %v352 = vrot.slane %v339, 3
        %v353 = vrot.slane %v339, 4
        %v354 = vrot.slane %v339, 5
        %v355 = vrot.slane %v339, 6
        %v356 = vrot.slane %v339, 7
        %v357 = vperm.slane %v339, 0
        %v358 = vperm.slane %v350, 0
        %v359 = vperm.slane %v351, 0
        %v360 = vperm.slane %v352, 0
        %v361 = vperm.slane %v353, 0
        %v362 = vperm.slane %v354, 0
        %v363 = vperm.slane %v355, 0
        %v364 = vperm.slane %v356, 0
        %365 = vset.pattern.permute.xlu0 0
        %366 = vperm.xlu0 %365, %v357
        %v367 = vpop.permute.xlu0 %366
        %369 = vset.pattern.permute.xlu0 0
        %370 = vperm.xlu0 %369, %v358
        %v371 = vpop.permute.xlu0 %370
        %373 = vset.pattern.permute.xlu0 0
        %374 = vperm.xlu0 %373, %v359
        %v375 = vpop.permute.xlu0 %374
        %377 = vset.pattern.permute.xlu0 0
        %378 = vperm.xlu0 %377, %v360
        %v379 = vpop.permute.xlu0 %378
        %381 = vset.pattern.permute.xlu0 0
        %382 = vperm.xlu0 %381, %v361
        %v383 = vpop.permute.xlu0 %382
        %385 = vset.pattern.permute.xlu0 0
        %386 = vperm.xlu0 %385, %v362
        %v387 = vpop.permute.xlu0 %386
        %389 = vset.pattern.permute.xlu0 0
        %390 = vperm.xlu0 %389, %v363
        %v391 = vpop.permute.xlu0 %390
        %393 = vset.pattern.permute.xlu0 0
        %394 = vperm.xlu0 %393, %v364
        %v395 = vpop.permute.xlu0 %394
        %v397 = vmul.f32 %v367, %v330
        %v398 = vmul.f32 %v367, %v331
        %v399 = vmul.f32 %v367, %v332
        %v400 = vmul.f32 %v371, %v330
        %v401 = vmul.f32 %v371, %v331
        %v402 = vmul.f32 %v371, %v332
        %v403 = vmul.f32 %v375, %v330
        %v404 = vmul.f32 %v375, %v331
        %v405 = vmul.f32 %v375, %v332
        %v406 = vmul.f32 %v379, %v330
        %v407 = vmul.f32 %v379, %v331
        %v408 = vmul.f32 %v379, %v332
        %v409 = vmul.f32 %v383, %v330
        %v410 = vmul.f32 %v383, %v331
        %v411 = vmul.f32 %v383, %v332
        %v412 = vmul.f32 %v387, %v330
        %v413 = vmul.f32 %v387, %v331
        %v414 = vmul.f32 %v387, %v332
        %v415 = vmul.f32 %v391, %v330
        %v416 = vmul.f32 %v391, %v331
        %v417 = vmul.f32 %v391, %v332
        %v418 = vmul.f32 %v395, %v330
        %v419 = vmul.f32 %v395, %v331
        %v420 = vmul.f32 %v395, %v332
        %v421 = vperm.slane %v340, 0
        %v422 = vperm.slane %v342, 0
        %v423 = vperm.slane %v343, 0
        %v424 = vperm.slane %v344, 0
        %v425 = vperm.slane %v345, 0
        %v426 = vperm.slane %v346, 0
        %v427 = vperm.slane %v347, 0
        %v428 = vperm.slane %v348, 0
        %429 = vset.pattern.permute.xlu0 0
        %430 = vperm.xlu0 %429, %v421
        %v431 = vpop.permute.xlu0 %430
        %433 = vset.pattern.permute.xlu0 0
        %434 = vperm.xlu0 %433, %v422
        %v435 = vpop.permute.xlu0 %434
        %437 = vset.pattern.permute.xlu0 0
        %438 = vperm.xlu0 %437, %v423
        %v439 = vpop.permute.xlu0 %438
        %441 = vset.pattern.permute.xlu0 0
        %442 = vperm.xlu0 %441, %v424
        %v443 = vpop.permute.xlu0 %442
        %445 = vset.pattern.permute.xlu0 0
        %446 = vperm.xlu0 %445, %v425
        %v447 = vpop.permute.xlu0 %446
        %449 = vset.pattern.permute.xlu0 0
        %450 = vperm.xlu0 %449, %v426
        %v451 = vpop.permute.xlu0 %450
        %453 = vset.pattern.permute.xlu0 0
        %454 = vperm.xlu0 %453, %v427
        %v455 = vpop.permute.xlu0 %454
        %457 = vset.pattern.permute.xlu0 0
        %458 = vperm.xlu0 %457, %v428
        %v459 = vpop.permute.xlu0 %458
        %v461 = vadd.f32 %v431, %v397
        %v462 = vadd.f32 %v431, %v398
        %v463 = vadd.f32 %v431, %v399
        %v464 = vadd.f32 %v435, %v400
        %v465 = vadd.f32 %v435, %v401
        %v466 = vadd.f32 %v435, %v402
        %v467 = vadd.f32 %v439, %v403
        %v468 = vadd.f32 %v439, %v404
        %v469 = vadd.f32 %v439, %v405
        %v470 = vadd.f32 %v443, %v406
        %v471 = vadd.f32 %v443, %v407
        %v472 = vadd.f32 %v443, %v408
        %v473 = vadd.f32 %v447, %v409
        %v474 = vadd.f32 %v447, %v410
        %v475 = vadd.f32 %v447, %v411
        %v476 = vadd.f32 %v451, %v412
        %v477 = vadd.f32 %v451, %v413
        %v478 = vadd.f32 %v451, %v414
        %v479 = vadd.f32 %v455, %v415
        %v480 = vadd.f32 %v455, %v416
        %v481 = vadd.f32 %v455, %v417
        %v482 = vadd.f32 %v459, %v418
        %v483 = vadd.f32 %v459, %v419
        %v484 = vadd.f32 %v459, %v420
        %485 = vset.pattern.permute.xlu0 1
        %486 = vperm.xlu0 %485, %v357
        %v487 = vpop.permute.xlu0 %486
        %489 = vset.pattern.permute.xlu0 1
        %490 = vperm.xlu0 %489, %v358
        %v491 = vpop.permute.xlu0 %490
        %493 = vset.pattern.permute.xlu0 1
        %494 = vperm.xlu0 %493, %v359
        %v495 = vpop.permute.xlu0 %494
        %497 = vset.pattern.permute.xlu0 1
        %498 = vperm.xlu0 %497, %v360
        %v499 = vpop.permute.xlu0 %498
        %501 = vset.pattern.permute.xlu0 1
        %502 = vperm.xlu0 %501, %v361
        %v503 = vpop.permute.xlu0 %502
        %505 = vset.pattern.permute.xlu0 1
        %506 = vperm.xlu0 %505, %v362
        %v507 = vpop.permute.xlu0 %506
        %509 = vset.pattern.permute.xlu0 1
        %510 = vperm.xlu0 %509, %v363
        %v511 = vpop.permute.xlu0 %510
        %513 = vset.pattern.permute.xlu0 1
        %514 = vperm.xlu0 %513, %v364
        %v515 = vpop.permute.xlu0 %514
        %v517 = vmul.f32 %v487, %v333
        %v518 = vmul.f32 %v487, %v334
        %v519 = vmul.f32 %v487, %v335
        %v520 = vmul.f32 %v491, %v333
        %v521 = vmul.f32 %v491, %v334
        %v522 = vmul.f32 %v491, %v335
        %v523 = vmul.f32 %v495, %v333
        %v524 = vmul.f32 %v495, %v334
        %v525 = vmul.f32 %v495, %v335
        %v526 = vmul.f32 %v499, %v333
        %v527 = vmul.f32 %v499, %v334
        %v528 = vmul.f32 %v499, %v335
        %v529 = vmul.f32 %v503, %v333
        %v530 = vmul.f32 %v503, %v334
        %v531 = vmul.f32 %v503, %v335
        %v532 = vmul.f32 %v507, %v333
        %v533 = vmul.f32 %v507, %v334
        %v534 = vmul.f32 %v507, %v335
        %v535 = vmul.f32 %v511, %v333
        %v536 = vmul.f32 %v511, %v334
        %v537 = vmul.f32 %v511, %v335
        %v538 = vmul.f32 %v515, %v333
        %v539 = vmul.f32 %v515, %v334
        %v540 = vmul.f32 %v515, %v335
        %v541 = vadd.f32 %v461, %v517
        %v542 = vadd.f32 %v462, %v518
        %v543 = vadd.f32 %v463, %v519
        %v544 = vadd.f32 %v464, %v520
        %v545 = vadd.f32 %v465, %v521
        %v546 = vadd.f32 %v466, %v522
        %v547 = vadd.f32 %v467, %v523
        %v548 = vadd.f32 %v468, %v524
        %v549 = vadd.f32 %v469, %v525
        %v550 = vadd.f32 %v470, %v526
        %v551 = vadd.f32 %v471, %v527
        %v552 = vadd.f32 %v472, %v528
        %v553 = vadd.f32 %v473, %v529
        %v554 = vadd.f32 %v474, %v530
        %v555 = vadd.f32 %v475, %v531
        %v556 = vadd.f32 %v476, %v532
        %v557 = vadd.f32 %v477, %v533
        %v558 = vadd.f32 %v478, %v534
        %v559 = vadd.f32 %v479, %v535
        %v560 = vadd.f32 %v480, %v536
        %v561 = vadd.f32 %v481, %v537
        %v562 = vadd.f32 %v482, %v538
        %v563 = vadd.f32 %v483, %v539
        %v564 = vadd.f32 %v484, %v540
        %565 = vset.pattern.permute.xlu0 2
        %566 = vperm.xlu0 %565, %v357
        %v567 = vpop.permute.xlu0 %566
        %569 = vset.pattern.permute.xlu0 2
        %570 = vperm.xlu0 %569, %v358
        %v571 = vpop.permute.xlu0 %570
        %573 = vset.pattern.permute.xlu0 2
        %574 = vperm.xlu0 %573, %v359
        %v575 = vpop.permute.xlu0 %574
        %577 = vset.pattern.permute.xlu0 2
        %578 = vperm.xlu0 %577, %v360
        %v579 = vpop.permute.xlu0 %578
        %581 = vset.pattern.permute.xlu0 2
        %582 = vperm.xlu0 %581, %v361
        %v583 = vpop.permute.xlu0 %582
        %585 = vset.pattern.permute.xlu0 2
        %586 = vperm.xlu0 %585, %v362
        %v587 = vpop.permute.xlu0 %586
        %589 = vset.pattern.permute.xlu0 2
        %590 = vperm.xlu0 %589, %v363
        %v591 = vpop.permute.xlu0 %590
        %593 = vset.pattern.permute.xlu0 2
        %594 = vperm.xlu0 %593, %v364
        %v595 = vpop.permute.xlu0 %594
        %v597 = vmul.f32 %v567, %v336
        %v598 = vmul.f32 %v567, %v337
        %v599 = vmul.f32 %v567, %v338
        %v600 = vmul.f32 %v571, %v336
        %v601 = vmul.f32 %v571, %v337
        %v602 = vmul.f32 %v571, %v338
        %v603 = vmul.f32 %v575, %v336
        %v604 = vmul.f32 %v575, %v337
        %v605 = vmul.f32 %v575, %v338
        %v606 = vmul.f32 %v579, %v336
        %v607 = vmul.f32 %v579, %v337
        %v608 = vmul.f32 %v579, %v338
        %v609 = vmul.f32 %v583, %v336
        %v610 = vmul.f32 %v583, %v337
        %v611 = vmul.f32 %v583, %v338
        %v612 = vmul.f32 %v587, %v336
        %v613 = vmul.f32 %v587, %v337
        %v614 = vmul.f32 %v587, %v338
        %v615 = vmul.f32 %v591, %v336
        %v616 = vmul.f32 %v591, %v337
        %v617 = vmul.f32 %v591, %v338
        %v618 = vmul.f32 %v595, %v336
        %v619 = vmul.f32 %v595, %v337
        %v620 = vmul.f32 %v595, %v338
        %v621 = vadd.f32 %v541, %v597
        %v622 = vadd.f32 %v542, %v598
        %v623 = vadd.f32 %v543, %v599
        %v624 = vadd.f32 %v544, %v600
        %v625 = vadd.f32 %v545, %v601
        %v626 = vadd.f32 %v546, %v602
        %v627 = vadd.f32 %v547, %v603
        %v628 = vadd.f32 %v548, %v604
        %v629 = vadd.f32 %v549, %v605
        %v630 = vadd.f32 %v550, %v606
        %v631 = vadd.f32 %v551, %v607
        %v632 = vadd.f32 %v552, %v608
        %v633 = vadd.f32 %v553, %v609
        %v634 = vadd.f32 %v554, %v610
        %v635 = vadd.f32 %v555, %v611
        %v636 = vadd.f32 %v556, %v612
        %v637 = vadd.f32 %v557, %v613
        %v638 = vadd.f32 %v558, %v614
        %v639 = vadd.f32 %v559, %v615
        %v640 = vadd.f32 %v560, %v616
        %v641 = vadd.f32 %v561, %v617
        %v642 = vadd.f32 %v562, %v618
        %v643 = vadd.f32 %v563, %v619
        %v644 = vadd.f32 %v564, %v620
        %v645 = vand.u32 2147483647, %v621
        %v646 = vand.u32 2147483647, %v622
        %v647 = vand.u32 2147483647, %v623
        %v648 = vand.u32 2147483647, %v624
        %v649 = vand.u32 2147483647, %v625
        %v650 = vand.u32 2147483647, %v626
        %v651 = vand.u32 2147483647, %v627
        %v652 = vand.u32 2147483647, %v628
        %v653 = vand.u32 2147483647, %v629
        %v654 = vand.u32 2147483647, %v630
        %v655 = vand.u32 2147483647, %v631
        %v656 = vand.u32 2147483647, %v632
        %v657 = vand.u32 2147483647, %v633
        %v658 = vand.u32 2147483647, %v634
        %v659 = vand.u32 2147483647, %v635
        %v660 = vand.u32 2147483647, %v636
        %v661 = vand.u32 2147483647, %v637
        %v662 = vand.u32 2147483647, %v638
        %v663 = vand.u32 2147483647, %v639
        %v664 = vand.u32 2147483647, %v640
        %v665 = vand.u32 2147483647, %v641
        %v666 = vand.u32 2147483647, %v642
        %v667 = vand.u32 2147483647, %v643
        %v668 = vand.u32 2147483647, %v644
        %vm669 = vcmask 146432
        %670 = vst.msk [vmem:[%s250] sm:$0xff] %vm669, %v645
        %671 = vst.msk [vmem:[%s250 + $0x8] sm:$0xff] %vm669, %v646
        %vm672 = vcmask 140288
        %673 = vst.msk [vmem:[%s250 + $0x10] sm:$0x3] %vm672, %v647
        %674 = vst.msk [vmem:[%s250 + $0x18] sm:$0xff] %vm669, %v648
        %675 = vst.msk [vmem:[%s250 + $0x20] sm:$0xff] %vm669, %v649
        %676 = vst.msk [vmem:[%s250 + $0x28] sm:$0x3] %vm672, %v650
        %677 = vst.msk [vmem:[%s250 + $0x30] sm:$0xff] %vm669, %v651
        %678 = vst.msk [vmem:[%s250 + $0x38] sm:$0xff] %vm669, %v652
        %679 = vst.msk [vmem:[%s250 + $0x40] sm:$0x3] %vm672, %v653
        %680 = vst.msk [vmem:[%s250 + $0x48] sm:$0xff] %vm669, %v654
        %681 = vst.msk [vmem:[%s250 + $0x50] sm:$0xff] %vm669, %v655
        %682 = vst.msk [vmem:[%s250 + $0x58] sm:$0x3] %vm672, %v656
        %683 = vst.msk [vmem:[%s250 + $0x60] sm:$0xff] %vm669, %v657
        %684 = vst.msk [vmem:[%s250 + $0x68] sm:$0xff] %vm669, %v658
        %685 = vst.msk [vmem:[%s250 + $0x70] sm:$0x3] %vm672, %v659
        %686 = vst.msk [vmem:[%s250 + $0x78] sm:$0xff] %vm669, %v660
        %687 = vst.msk [vmem:[%s250 + $0x80] sm:$0xff] %vm669, %v661
        %688 = vst.msk [vmem:[%s250 + $0x88] sm:$0x3] %vm672, %v662
        %689 = vst.msk [vmem:[%s250 + $0x90] sm:$0xff] %vm669, %v663
        %690 = vst.msk [vmem:[%s250 + $0x98] sm:$0xff] %vm669, %v664
        %691 = vst.msk [vmem:[%s250 + $0xa0] sm:$0x3] %vm672, %v665
        %692 = vst.msk [vmem:[%s250 + $0xa8] sm:$0xff] %vm669, %v666
        %693 = vst.msk [vmem:[%s250 + $0xb0] sm:$0xff] %vm669, %v667
        %694 = vst.msk [vmem:[%s250 + $0xb8] sm:$0x3] %vm672, %v668
        %s695 = smul.u32 8, %s22
        %p696 = scmp.lt.s32.totalorder %s21, 1
        %s697 = scalar_select %p696, %s21, 1
        %p698 = scmp.lt.s32.totalorder %s695, 7
        %s699 = scalar_select %p698, %s695, 7
        %s700 = smul.addr %s699, 3
        %s701 = smul.addr %s697, 24
        %s702 = sadd.s32 %s700, %s701
        %s703 = smul.addr %s702, 8
        %s704 = scalar_lea.vmem %s3, %s703
        // Predicated region
        $region37: #{model_forward.1} parent=31 // pred_check
          %p705 = pneg %p127
        $region38: #{model_forward.1} parent=31 // pred_check_branch
          %707 = sbr.rel (%p705) target = $region40
        $region39: #{model_forward.1} parent=31 // pred_region
          %s708 = smul.u32 8, %s22
        $region40: #{model_forward.1} parent=31 // pred_fallthru
          _
      $region32: #{model_forward.1} parent=5 // pred_fallthru
        _
      %p709 = scmp.le.s32.totalorder 2, %s12
      // Predicated region
      $region41: #{model_forward.1} parent=5 // pred_check
        %p710 = pneg %p709
      $region42: #{model_forward.1} parent=5 // pred_check_branch
        %712 = sbr.rel (%p710) target = $region44
      $region43: #{model_forward.1} parent=5 // pred_region
        %s713 = ssub.s32 %s12, 2
        // Predicated region
        $region45: #{model_forward.1} parent=43 // pred_check
          %p714 = pneg %p133
        $region46: #{model_forward.1} parent=43 // pred_check_branch
          %716 = sbr.rel (%p714) target = $region48
        $region47: #{model_forward.1} parent=43 // pred_region
          %s717 = smul.u32 8, %s24
          %p718 = scmp.lt.s32.totalorder %s23, 1
          %s719 = scalar_select %p718, %s23, 1
          %p720 = scmp.lt.s32.totalorder %s717, 7
          %s721 = scalar_select %p720, %s717, 7
          %s722 = smul.addr %s721, 3
          %s723 = smul.addr %s719, 24
          %s724 = sadd.s32 %s722, %s723
          %s725 = smul.addr %s724, 8
          %s726 = scalar_lea.vmem %s3, %s725
        $region48: #{model_forward.1} parent=43 // pred_fallthru
          _
      $region44: #{model_forward.1} parent=5 // pred_fallthru
        _
    $region6: #{model_forward.1} parent=1 // loop_footer
      %s16 = sadd.s32 1, %s12
    $region7: #{model_forward.1} parent=1 // loop_footer_branch
      %11 = sbr.rel target = $region3
    $region8: #{model_forward.1} parent=1 // loop_exit
      _
    %727 = vsyncpa [#allocation3], 1
    %s728 = scalar_lea.sflag [#allocation3], 1
    %729 = vsyncpa %s728, 1

</llo_original>
